<compile_context>
chip_gen: v7x
topology: tpu7x:2x2x1
jax: 0.10.0
libtpu: 0.0.40
codegen_flags: <defaults>
</compile_context>

<pallas_src>
import jax
import jax.numpy as jnp
from jax.experimental import pallas as pl
from jax.experimental.pallas import tpu as pltpu


def _build_phase_matrix(weight, W, Wo, dtype):
    """Fold the 2x2 / stride-2 conv weights into column-unshuffle matrices.

    Returns M of shape (phases, 2*W, Wo) such that for the row vector
    r = [x[c, 2h, :], x[c, 2h+1, :]] (length 2W), r @ M[p] equals the phase-p
    conv output row out[c, p, h, :].  Odd W (floor behavior) is handled by the
    `col < Wo` mask; odd H is handled by the wrapper truncation.
    """
    w2 = weight[:, 0, :, :]                        # (phases, 2, 2)
    s = jnp.arange(2 * W)
    a = s // W                                     # input-row parity (0 / 1)
    w_in = s % W                                   # original column index
    b = w_in % 2                                   # column parity in 2x2 window
    col = w_in // 2                                # destination output column
    sel = (col[:, None] == jnp.arange(Wo)[None, :]) & (col[:, None] < Wo)
    vals = w2[:, a, b]                             # (phases, 2W)
    return sel.astype(dtype)[None, :, :] * vals[:, :, None].astype(dtype)


def _pick_chunk_c(C, Ho, W, itemsize, budget_bytes=8 << 20):
    """Largest divisor of C whose (chunk_c*Ho, 2W) input slab fits the budget.

    chunk_c < C additionally requires chunk_c*Ho % 8 == 0 (sublane-aligned
    BlockSpec).  Falls back to C (single chunk) if nothing smaller qualifies.
    """
    row_bytes = Ho * 2 * W * itemsize
    for d in range(C, 0, -1):
        if C % d:
            continue
        if d * row_bytes <= budget_bytes and (d == C or (d * Ho) % 8 == 0):
            return d
    return C


def phase_kernel(m_ref, x_ref, o_ref):
    # m_ref: (phases, 2W, Wo)   weight-folded unshuffle matrices (constant
    #                           index_map -> fetched once, VMEM-resident).
    # x_ref: (1, Cb*Ho, 2W)     one (batch, channel-chunk) slab; row r = c*Ho+h
    #                           holds input rows 2h and 2h+1 of channel c
    #                           concatenated along the lane axis.
    # o_ref: (1, Cb, phases, Ho, Wo)
    _, Cb, phases, Ho, Wo = o_ref.shape
    x = x_ref[0]                                   # (Cb*Ho, 2W)
    for p in range(phases):                        # small & static -> unrolled
        yp = jnp.dot(x, m_ref[p], preferred_element_type=jnp.float32)  # (Cb*Ho, Wo)
        o_ref[0, :, p, :, :] = yp.reshape(Cb, Ho, Wo).astype(o_ref.dtype)


def phase_forward(x, weight):
    """x: (N, C, H, W); weight: (phases, 1, 2, 2) (all ones in the Phase module).

    Returns (N, C*phases, H//2, W//2) float32, matching the PyTorch module.
    """
    N, C, H, W = x.shape
    phases = weight.shape[0]
    Ho, Wo = H // 2, W // 2

    if H % 2:                                      # conv floor behavior (odd H)
        x = x[:, :, : 2 * Ho, :]
    # Free (contiguous) reshape: even/odd input rows of each output row end up
    # side by side along the lane axis.  Odd W is handled inside M.
    x2 = x.reshape(N, C * Ho, 2 * W)

    m_dtype = x2.dtype if x2.dtype == jnp.bfloat16 else jnp.float32
    m = _build_phase_matrix(weight, W, Wo, m_dtype)    # (phases, 2W, Wo)

    itemsize = jnp.dtype(x2.dtype).itemsize
    chunk_c = _pick_chunk_c(C, Ho, W, itemsize)
    n_chunks = C // chunk_c

    # Explicit VMEM budget: double-buffered in/out blocks + resident M, with
    # headroom for Mosaic scratch; capped below v7x's 64 MiB physical VMEM.
    in_bytes = chunk_c * Ho * 2 * W * itemsize
    out_bytes = chunk_c * phases * Ho * Wo * 4
    m_bytes = phases * 2 * W * Wo * jnp.dtype(m_dtype).itemsize
    vmem_limit = int(min(max(4 * (in_bytes + out_bytes) + 2 * m_bytes + (4 << 20),
                             8 << 20),
                         64 << 20))

    out5 = pl.pallas_call(
        phase_kernel,
        out_shape=jax.ShapeDtypeStruct((N, C, phases, Ho, Wo), jnp.float32),
        grid_spec=pltpu.PrefetchScalarGridSpec(
            num_scalar_prefetch=0,
            grid=(N, n_chunks),
            in_specs=[
                # Folded unshuffle matrices: constant block -> fetched once.
                pl.BlockSpec((phases, 2 * W, Wo), lambda n, j: (0, 0, 0)),
                # One lane-dense (channel-chunk x 2W) slab per step.
                pl.BlockSpec((1, chunk_c * Ho, 2 * W), lambda n, j: (n, j, 0)),
            ],
            out_specs=pl.BlockSpec((1, chunk_c, phases, Ho, Wo),
                                   lambda n, j: (n, j, 0, 0, 0)),
        ),
        compiler_params=pltpu.CompilerParams(
            dimension_semantics=("parallel", "parallel"),
            vmem_limit_bytes=vmem_limit),
    )(m, x2)

    # Free reshape: (N, C, phases, Ho, Wo) -> (N, C*phases, Ho, Wo).
    return out5.reshape(N, C * phases, Ho, Wo)


def phase_reference(x, weight):
    N, C, H, W = x.shape
    phases = weight.shape[0]
    Ho, Wo = H // 2, W // 2
    xr = x[:, :, : 2 * Ho, : 2 * Wo].reshape(N, C, Ho, 2, Wo, 2)
    out = jnp.einsum('nchawb,pab->ncphw', xr, weight[:, 0])
    return out.reshape(N, C * phases, Ho, Wo)


if __name__ == "__main__":
    size = 2                       # Phase(size) -> phases = size * size = 4
    phases = size * size
    key = jax.random.PRNGKey(0)
    x = jax.random.normal(key, (2, 4, 16, 16), dtype=jnp.float32)
    # Deterministic parameter init identical to the module: all-ones filters.
    weight = jnp.ones((phases, 1, 2, 2), dtype=jnp.float32)

    out = jax.block_until_ready(phase_forward(x, weight))
    ref = phase_reference(x, weight)
    assert out.shape == (2, 4 * phases, 8, 8), out.shape
    assert jnp.allclose(out, ref, atol=1e-5, rtol=1e-5)

    # Extra sanity check: arbitrary weights exercise the weight-folding path.
    w_rand = jax.random.normal(jax.random.PRNGKey(1), (phases, 1, 2, 2),
                               dtype=jnp.float32)
    out2 = jax.block_until_ready(phase_forward(x, w_rand))
    ref2 = phase_reference(x, w_rand)
    assert jnp.allclose(out2, ref2, atol=1e-4, rtol=1e-4)

    print("KERNEL_OK")
</pallas_src>

<mosaic_0001>
module attributes {stable_mosaic.version = 11 : i64} {
  func.func @phase_kernel(%arg0: i32, %arg1: i32, %arg2: memref<4x32x8xf32, #tpu.memory_space<vmem>>, %arg3: memref<1x32x32xf32, #tpu.memory_space<vmem>>, %arg4: memref<1x4x4x8x8xf32, #tpu.memory_space<vmem>>) attributes {dimension_semantics = [#tpu.dimension_semantics<parallel>, #tpu.dimension_semantics<parallel>], iteration_bounds = array<i64: 2, 1>, scalar_prefetch = 0 : i64, scratch_operands = 0 : i64, tpu.core_type = #tpu.core_type<tc>, window_params = [{pipeline_mode = #tpu.pipeline_mode<synchronous>, transform_indices = @transform_0, window_bounds = array<i64: 4, 32, 8>}, {transform_indices = @transform_1, window_bounds = array<i64: 1, 32, 32>}, {transform_indices = @transform_2, window_bounds = array<i64: 1, 4, 4, 8, 8>}]} {
    %c0 = arith.constant 0 : index
    %c0_0 = arith.constant 0 : index
    %c0_1 = arith.constant 0 : index
    %0 = vector.load %arg3[%c0, %c0_0, %c0_1] : memref<1x32x32xf32, #tpu.memory_space<vmem>>, vector<1x32x32xf32>
    %1 = vector.shape_cast %0 : vector<1x32x32xf32> to vector<32x32xf32>
    %c0_2 = arith.constant 0 : index
    %c0_3 = arith.constant 0 : index
    %c0_4 = arith.constant 0 : index
    %2 = vector.load %arg2[%c0_2, %c0_3, %c0_4] : memref<4x32x8xf32, #tpu.memory_space<vmem>>, vector<1x32x8xf32>
    %3 = vector.shape_cast %2 : vector<1x32x8xf32> to vector<32x8xf32>
    %cst = arith.constant dense<0.000000e+00> : vector<32x8xf32>
    %4 = tpu.matmul %1, %3, %cst {dimension_numbers = #tpu.dot_dimension_numbers<[1], [0], [0], [1], [0, 0, 1, 1], [], []>} : vector<32x32xf32>, vector<32x8xf32>, vector<32x8xf32> -> vector<32x8xf32>
    %5 = vector.shape_cast %4 : vector<32x8xf32> to vector<4x8x8xf32>
    %c0_5 = arith.constant 0 : index
    %c0_6 = arith.constant 0 : index
    %c0_7 = arith.constant 0 : index
    %c0_8 = arith.constant 0 : index
    %c0_9 = arith.constant 0 : index
    %6 = vector.load %arg4[%c0_5, %c0_6, %c0_7, %c0_8, %c0_9] : memref<1x4x4x8x8xf32, #tpu.memory_space<vmem>>, vector<1x4x1x8x8xf32>
    %7 = vector.shape_cast %6 : vector<1x4x1x8x8xf32> to vector<4x8x8xf32>
    %8 = vector.shape_cast %5 : vector<4x8x8xf32> to vector<1x4x1x8x8xf32>
    tpu.vector_store %arg4[%c0_5, %c0_6, %c0_7, %c0_8, %c0_9], %8 {strides = array<i32>} : memref<1x4x4x8x8xf32, #tpu.memory_space<vmem>>, vector<1x4x1x8x8xf32>,
    %c1 = arith.constant 1 : index
    %c0_10 = arith.constant 0 : index
    %c0_11 = arith.constant 0 : index
    %9 = vector.load %arg2[%c1, %c0_10, %c0_11] : memref<4x32x8xf32, #tpu.memory_space<vmem>>, vector<1x32x8xf32>
    %10 = vector.shape_cast %9 : vector<1x32x8xf32> to vector<32x8xf32>
    %cst_12 = arith.constant dense<0.000000e+00> : vector<32x8xf32>
    %11 = tpu.matmul %1, %10, %cst_12 {dimension_numbers = #tpu.dot_dimension_numbers<[1], [0], [0], [1], [0, 0, 1, 1], [], []>} : vector<32x32xf32>, vector<32x8xf32>, vector<32x8xf32> -> vector<32x8xf32>
    %12 = vector.shape_cast %11 : vector<32x8xf32> to vector<4x8x8xf32>
    %c0_13 = arith.constant 0 : index
    %c0_14 = arith.constant 0 : index
    %c1_15 = arith.constant 1 : index
    %c0_16 = arith.constant 0 : index
    %c0_17 = arith.constant 0 : index
    %13 = vector.load %arg4[%c0_13, %c0_14, %c1_15, %c0_16, %c0_17] : memref<1x4x4x8x8xf32, #tpu.memory_space<vmem>>, vector<1x4x1x8x8xf32>
    %14 = vector.shape_cast %13 : vector<1x4x1x8x8xf32> to vector<4x8x8xf32>
    %15 = vector.shape_cast %12 : vector<4x8x8xf32> to vector<1x4x1x8x8xf32>
    tpu.vector_store %arg4[%c0_13, %c0_14, %c1_15, %c0_16, %c0_17], %15 {strides = array<i32>} : memref<1x4x4x8x8xf32, #tpu.memory_space<vmem>>, vector<1x4x1x8x8xf32>,
    %c2 = arith.constant 2 : index
    %c0_18 = arith.constant 0 : index
    %c0_19 = arith.constant 0 : index
    %16 = vector.load %arg2[%c2, %c0_18, %c0_19] : memref<4x32x8xf32, #tpu.memory_space<vmem>>, vector<1x32x8xf32>
    %17 = vector.shape_cast %16 : vector<1x32x8xf32> to vector<32x8xf32>
    %cst_20 = arith.constant dense<0.000000e+00> : vector<32x8xf32>
    %18 = tpu.matmul %1, %17, %cst_20 {dimension_numbers = #tpu.dot_dimension_numbers<[1], [0], [0], [1], [0, 0, 1, 1], [], []>} : vector<32x32xf32>, vector<32x8xf32>, vector<32x8xf32> -> vector<32x8xf32>
    %19 = vector.shape_cast %18 : vector<32x8xf32> to vector<4x8x8xf32>
    %c0_21 = arith.constant 0 : index
    %c0_22 = arith.constant 0 : index
    %c2_23 = arith.constant 2 : index
    %c0_24 = arith.constant 0 : index
    %c0_25 = arith.constant 0 : index
    %20 = vector.load %arg4[%c0_21, %c0_22, %c2_23, %c0_24, %c0_25] : memref<1x4x4x8x8xf32, #tpu.memory_space<vmem>>, vector<1x4x1x8x8xf32>
    %21 = vector.shape_cast %20 : vector<1x4x1x8x8xf32> to vector<4x8x8xf32>
    %22 = vector.shape_cast %19 : vector<4x8x8xf32> to vector<1x4x1x8x8xf32>
    tpu.vector_store %arg4[%c0_21, %c0_22, %c2_23, %c0_24, %c0_25], %22 {strides = array<i32>} : memref<1x4x4x8x8xf32, #tpu.memory_space<vmem>>, vector<1x4x1x8x8xf32>,
    %c3 = arith.constant 3 : index
    %c0_26 = arith.constant 0 : index
    %c0_27 = arith.constant 0 : index
    %23 = vector.load %arg2[%c3, %c0_26, %c0_27] : memref<4x32x8xf32, #tpu.memory_space<vmem>>, vector<1x32x8xf32>
    %24 = vector.shape_cast %23 : vector<1x32x8xf32> to vector<32x8xf32>
    %cst_28 = arith.constant dense<0.000000e+00> : vector<32x8xf32>
    %25 = tpu.matmul %1, %24, %cst_28 {dimension_numbers = #tpu.dot_dimension_numbers<[1], [0], [0], [1], [0, 0, 1, 1], [], []>} : vector<32x32xf32>, vector<32x8xf32>, vector<32x8xf32> -> vector<32x8xf32>
    %26 = vector.shape_cast %25 : vector<32x8xf32> to vector<4x8x8xf32>
    %c0_29 = arith.constant 0 : index
    %c0_30 = arith.constant 0 : index
    %c3_31 = arith.constant 3 : index
    %c0_32 = arith.constant 0 : index
    %c0_33 = arith.constant 0 : index
    %27 = vector.load %arg4[%c0_29, %c0_30, %c3_31, %c0_32, %c0_33] : memref<1x4x4x8x8xf32, #tpu.memory_space<vmem>>, vector<1x4x1x8x8xf32>
    %28 = vector.shape_cast %27 : vector<1x4x1x8x8xf32> to vector<4x8x8xf32>
    %29 = vector.shape_cast %26 : vector<4x8x8xf32> to vector<1x4x1x8x8xf32>
    tpu.vector_store %arg4[%c0_29, %c0_30, %c3_31, %c0_32, %c0_33], %29 {strides = array<i32>} : memref<1x4x4x8x8xf32, #tpu.memory_space<vmem>>, vector<1x4x1x8x8xf32>,
    return
  }
  func.func @transform_0(%arg0: i32, %arg1: i32) -> (i32, i32, i32) {
    %c0_i32 = arith.constant 0 : i32
    %c0_i32_0 = arith.constant 0 : i32
    %c0_i32_1 = arith.constant 0 : i32
    %c0_i32_2 = arith.constant 0 : i32
    return %c0_i32, %c0_i32_0, %c0_i32_1 : i32, i32, i32
  }
  func.func @transform_1(%arg0: i32, %arg1: i32) -> (i32, i32, i32) {
    %c0_i32 = arith.constant 0 : i32
    %c0_i32_0 = arith.constant 0 : i32
    return %arg0, %arg1, %c0_i32 : i32, i32, i32
  }
  func.func @transform_2(%arg0: i32, %arg1: i32) -> (i32, i32, i32, i32, i32) {
    %c0_i32 = arith.constant 0 : i32
    %c0_i32_0 = arith.constant 0 : i32
    %c0_i32_1 = arith.constant 0 : i32
    %c0_i32_2 = arith.constant 0 : i32
    return %arg0, %arg1, %c0_i32, %c0_i32_0, %c0_i32_1 : i32, i32, i32, i32, i32
  }
}

</mosaic_0001>

<llo_original>
// kernel: tpu_custom_call.1
$region0: #{tpu_custom_call.1}
  #allocation0 [shape = 'u32[]', space=smem, size = 0x4, offset = 0x4, fixed_abs, tag = 'smem constant byte address 0x4 - core index']
  #allocation1 [shape = 'u32[144,128]{1,0:T(1,128)}', space=vmem, size = 0x12000, scoped, tag = 'internal scratch']
  %s0 = inlined_call_operand.vmem [shape: f32[4,32,8], index: 0, kind: input, shape index: {}]
  %s1 = inlined_call_operand.vmem [shape: f32[2,32,32], index: 1, kind: input, shape index: {}]
  %s2 = inlined_call_operand.hbm [shape: f32[2,4,4,8,8], index: 2, kind: output, shape index: {}]
  %s3 = sld [smem:[#allocation0]]
  $region41: #{tpu_custom_call.1} parent=0
    _
  %s5 = ssub.s32 1, %s3
  %s6 = scalar_select 0, %s5, %s3
  $region1: #{tpu_custom_call.1} parent=0
    #allocation2 [shape = 'u8[131072]{0}', space=vmem, size = 0x20000, scoped, tag = 'output window, operand 0']
    #allocation3 [shape = 's32[2]{0}', space=sflag, size = 0x8, scoped, tag = 'scoped memory for tpu_custom_call.1']
    %7 = vsyncpa [#allocation3], 0
    %s8 = scalar_lea.sflag [#allocation3], 1
    %9 = vsyncpa %s8, 0
    loop: start=0, step=1, limit=4
    $region2: #{tpu_custom_call.1} parent=1 // loop_pre_header
      _
    $region3: #{tpu_custom_call.1} parent=1 // loop_header
      %s11 = sphi 0, %s15
      %p12 = scmp.ge.s32.totalorder %s11, 4
      %s18 = sphi 0, %s30
      %s19 = sphi 0, %s26
      %s20 = sphi 0, %s18
      %s21 = sphi 0, %s19
      %s22 = sphi 0, %s20
      %s23 = sphi 0, %s21
      %s31 = sphi 0, %s31
      %s33 = sphi 0, %s31
      %s34 = sphi 0, %s33
      %s48 = sphi 0, %s34
      %s56 = sphi 0, %s58
      %s59 = sphi 0, %s56
      %s60 = sphi 0, %s59
      %s76 = sphi 0, %s60
      %s84 = sphi 0, %s86
      %s87 = sphi 0, %s84
      %s88 = sphi 0, %s87
      %s104 = sphi 0, %s88
    $region4: #{tpu_custom_call.1} parent=1 // loop_header_branch
      %14 = sbr.rel (%p12) target = $region8
    $region5: #{tpu_custom_call.1} parent=1 // loop_body
      %s16 = ssub.s32 %s11, 1
      %s17 = ssub.s32 %s11, 2
      %s24 = sadd.s32 1, %s19
      %p25 = scmp.ge.s32.totalorder %s24, 1
      %s26 = scalar_select %p25, 0, %s24
      %s27 = sadd.s32 1, %s18
      %s28 = scalar_select %p25, %s27, %s18
      %p29 = scmp.ge.s32.totalorder %s28, 2
      %s30 = scalar_select %p29, 0, %s28
      %s32 = sadd.s32 %s31, 1
      %p35 = scmp.eq.s32.totalorder %s11, 1
      %p36 = scmp.ne.s32.totalorder %s31, %s33
      %p37 = scmp.eq.s32.totalorder %s11, 0
      %p38 = por %p36, %p37
      %p39 = scmp.ne.s32.totalorder %s31, %s33
      %p40 = scmp.eq.s32.totalorder %s16, 1
      %p41 = por %p39, %p40
      %p42 = scmp.ne.s32.totalorder %s33, %s34
      %p43 = scmp.eq.s32.totalorder %s16, 0
      %p44 = por %p42, %p43
      %p45 = scmp.ne.s32.totalorder %s33, %s34
      %p46 = scmp.eq.s32.totalorder %s17, 1
      %p47 = por %p45, %p46
      %p49 = scmp.ne.s32.totalorder %s34, %s48
      %p50 = scmp.eq.s32.totalorder %s17, 0
      %p51 = por %p49, %p50
      %s52 = ssub.s32 %s18, %s30
      %s53 = ssub.s32 %s19, %s26
      %s54 = sor.u32 %s52, %s53
      %p55 = scmp.eq.s32.totalorder %s54, 0
      %s57 = sadd.s32 %s56, 1
      %s58 = scalar_select %p55, %s56, %s57
      %p61 = pneg %p55
      %p62 = scmp.eq.s32.totalorder %s11, 1
      %p63 = por %p61, %p62
      %p64 = scmp.ne.s32.totalorder %s56, %s59
      %p65 = scmp.eq.s32.totalorder %s11, 0
      %p66 = por %p64, %p65
      %p67 = scmp.ne.s32.totalorder %s56, %s59
      %p68 = scmp.eq.s32.totalorder %s16, 1
      %p69 = por %p67, %p68
      %p70 = scmp.ne.s32.totalorder %s59, %s60
      %p71 = scmp.eq.s32.totalorder %s16, 0
      %p72 = por %p70, %p71
      %p73 = scmp.ne.s32.totalorder %s59, %s60
      %p74 = scmp.eq.s32.totalorder %s17, 1
      %p75 = por %p73, %p74
      %p77 = scmp.ne.s32.totalorder %s60, %s76
      %p78 = scmp.eq.s32.totalorder %s17, 0
      %p79 = por %p77, %p78
      %s80 = ssub.s32 %s18, %s30
      %s81 = ssub.s32 %s19, %s26
      %s82 = sor.u32 %s80, %s81
      %p83 = scmp.eq.s32.totalorder %s82, 0
      %s85 = sadd.s32 %s84, 1
      %s86 = scalar_select %p83, %s84, %s85
      %p89 = pneg %p83
      %p90 = scmp.eq.s32.totalorder %s11, 1
      %p91 = por %p89, %p90
      %p92 = scmp.ne.s32.totalorder %s84, %s87
      %p93 = scmp.eq.s32.totalorder %s11, 0
      %p94 = por %p92, %p93
      %p95 = scmp.ne.s32.totalorder %s84, %s87
      %p96 = scmp.eq.s32.totalorder %s16, 1
      %p97 = por %p95, %p96
      %p98 = scmp.ne.s32.totalorder %s87, %s88
      %p99 = scmp.eq.s32.totalorder %s16, 0
      %p100 = por %p98, %p99
      %p101 = scmp.ne.s32.totalorder %s87, %s88
      %p102 = scmp.eq.s32.totalorder %s17, 1
      %p103 = por %p101, %p102
      %p105 = scmp.ne.s32.totalorder %s88, %s104
      %p106 = scmp.eq.s32.totalorder %s17, 0
      %p107 = por %p105, %p106
      %p108 = scmp.le.s32.totalorder 1, %s11
      %p109 = scmp.lt.s32.totalorder %s11, 3
      %p110 = pnand %p108, %p109
      %p111 = pneg %p110
      // Predicated region
      $region9: #{tpu_custom_call.1} parent=5 // pred_check
        _
      $region10: #{tpu_custom_call.1} parent=5 // pred_check_branch
        %113 = sbr.rel (%p110) target = $region12
      $region11: #{tpu_custom_call.1} parent=5 // pred_region
        %s114 = ssub.s32 %s11, 1
        // Predicated region
        $region13: #{tpu_custom_call.1} parent=11 // pred_check
          %p115 = pneg %p44
        $region14: #{tpu_custom_call.1} parent=11 // pred_check_branch
          %117 = sbr.rel (%p115) target = $region16
        $region15: #{tpu_custom_call.1} parent=11 // pred_region
          _
        $region16: #{tpu_custom_call.1} parent=11 // pred_fallthru
          _
      $region12: #{tpu_custom_call.1} parent=5 // pred_fallthru
        _
      %p118 = scmp.lt.s32.totalorder %s11, 2
      // Predicated region
      $region17: #{tpu_custom_call.1} parent=5 // pred_check
        %p119 = pneg %p118
      $region18: #{tpu_custom_call.1} parent=5 // pred_check_branch
        %121 = sbr.rel (%p119) target = $region20
      $region19: #{tpu_custom_call.1} parent=5 // pred_region
        // Predicated region
        $region21: #{tpu_custom_call.1} parent=19 // pred_check
          %p122 = pneg %p66
        $region22: #{tpu_custom_call.1} parent=19 // pred_check_branch
          %124 = sbr.rel (%p122) target = $region24
        $region23: #{tpu_custom_call.1} parent=19 // pred_region
          %s125 = smul.u32 4, %s19
          %p126 = scmp.lt.s32.totalorder %s18, 1
          %s127 = scalar_select %p126, %s18, 1
          %p128 = scmp.lt.s32.totalorder %s125, 3
          %s129 = scalar_select %p128, %s125, 3
          %s130 = smul.addr %s127, 4
          %s131 = sadd.s32 %s129, %s130
          %s132 = smul.addr %s131, 8
          %s133 = scalar_lea.vmem %s1, %s132
          %s134 = smul.u32 4, %s19
        $region24: #{tpu_custom_call.1} parent=19 // pred_fallthru
          _
      $region20: #{tpu_custom_call.1} parent=5 // pred_fallthru
        _
      %p135 = scmp.le.s32.totalorder 1, %s11
      %p136 = scmp.lt.s32.totalorder %s11, 3
      %p137 = pnand %p135, %p136
      %p138 = pneg %p137
      // Predicated region
      $region25: #{tpu_custom_call.1} parent=5 // pred_check
        _
      $region26: #{tpu_custom_call.1} parent=5 // pred_check_branch
        %140 = sbr.rel (%p137) target = $region28
      $region27: #{tpu_custom_call.1} parent=5 // pred_region
        %s141 = ssub.s32 %s11, 1
        %p142 = pneg %p44
        %p143 = pneg %p41
        %s144 = smul.u32 4, %s21
        %p145 = scmp.lt.s32.totalorder %s20, 1
        %s146 = scalar_select %p145, %s20, 1
        %p147 = scmp.lt.s32.totalorder %s144, 3
        %s148 = scalar_select %p147, %s144, 3
        %s149 = smul.addr %s146, 4
        %s150 = sadd.s32 %s148, %s149
        %s151 = smul.addr %s150, 8
        %s152 = scalar_lea.vmem %s1, %s151
        %p153 = pneg %p72
        %p154 = pneg %p69
        %p155 = pneg %p100
        %p156 = pneg %p97
        %s157 = sand.u32 %s87, 1
        %s158 = scalar_lea.sflag [#allocation3], %s157
        %s159 = sand.u32 %s87, 1
        %s160 = smul.addr %s159, 128
        %s161 = scalar_lea.vmem [#allocation2], %s160
        %s162 = smul.u32 4, %s21
        %p163 = scmp.lt.s32.totalorder %s20, 1
        %s164 = scalar_select %p163, %s20, 1
        %p165 = scmp.lt.s32.totalorder %s162, 3
        %s166 = scalar_select %p165, %s162, 3
        %s167 = smul.addr %s164, 4
        %s168 = sadd.s32 %s166, %s167
        %s169 = smul.addr %s168, 8
        %s170 = scalar_lea.vmem %s1, %s169
        %s171 = smul.u32 4, %s21
        %s172 = smul.u32 4, %s21
        %v173 = vld [vmem:[%s170] sm:$0xff]
        %v174 = vld [vmem:[%s170 + $0x8] sm:$0xff]
        %v175 = vld [vmem:[%s170 + $0x10] sm:$0xff]
        %v176 = vld [vmem:[%s170 + $0x18] sm:$0xff]
        %v177 = vld [vmem:[%s0] sm:$0xff]
        %v178 = vld [vmem:[%s0 + $0x8] sm:$0xff]
        %v179 = vld [vmem:[%s0 + $0x10] sm:$0xff]
        %v180 = vld [vmem:[%s0 + $0x18] sm:$0xff]
        %vm181 = vcmask 261120
        %v183 = vsel %vm181, %v173, 0
        %v186 = vsel %vm181, %v174, 0
        %v189 = vsel %vm181, %v175, 0
        %v192 = vsel %vm181, %v176, 0
        %194 = vmatprep.subr.mxu0 0.0
        %195 = vmatpush1.msra.mxu0 %v177
        %196 = vmatprep.subr.mxu0 0.0
        %197 = vmatpush1.msra.mxu0 %v178
        %198 = vmatprep.subr.mxu0 0.0
        %199 = vmatpush1.msra.mxu0 %v179
        %200 = vmatprep.subr.mxu0 0.0
        %201 = vmatpush1.msra.mxu0 %v180
        %202 = vmatprep.subr.mxu0 0.0
        %203 = vmatpush1.msra.mxu0 0.0
        %204 = vmatprep.subr.mxu0 0.0
        %205 = vmatpush1.msra.mxu0 0.0
        %206 = vmatprep.subr.mxu0 0.0
        %207 = vmatpush1.msra.mxu0 0.0
        %208 = vmatprep.subr.mxu0 0.0
        %209 = vmatpush1.msra.mxu0 0.0
        %210 = vmatprep.subr.mxu0 0.0
        %211 = vmatpush1.msra.mxu0 0.0
        %212 = vmatprep.subr.mxu0 0.0
        %213 = vmatpush1.msra.mxu0 0.0
        %214 = vmatprep.subr.mxu0 0.0
        %215 = vmatpush1.msra.mxu0 0.0
        %216 = vmatprep.subr.mxu0 0.0
        %217 = vmatpush1.msra.mxu0 0.0
        %218 = vmatprep.subr.mxu0 0.0
        %219 = vmatpush1.msra.mxu0 0.0
        %220 = vmatprep.subr.mxu0 0.0
        %221 = vmatpush1.msra.mxu0 0.0
        %222 = vmatprep.subr.mxu0 0.0
        %223 = vmatpush1.msra.mxu0 0.0
        %224 = vmatprep.subr.mxu0 0.0
        %225 = vmatpush1.msra.mxu0 0.0
        %226 = vmatprep.subr.mxu0 0.0
        %227 = vmatpush1.msra.mxu0 0.0
        %228 = vmatprep.subr.mxu0 0.0
        %229 = vmatpush1.msra.mxu0 0.0
        %230 = vmatprep.subr.mxu0 0.0
        %231 = vmatpush1.msra.mxu0 0.0
        %232 = vmatprep.subr.mxu0 0.0
        %233 = vmatpush1.msra.mxu0 0.0
        %234 = vmatprep.subr.mxu0 0.0
        %235 = vmatpush1.msra.mxu0 0.0
        %236 = vmatprep.subr.mxu0 0.0
        %237 = vmatpush1.msra.mxu0 0.0
        %238 = vmatprep.subr.mxu0 0.0
        %239 = vmatpush1.msra.mxu0 0.0
        %240 = vmatprep.subr.mxu0 0.0
        %241 = vmatpush1.msra.mxu0 0.0
        %242 = vmatprep.subr.mxu0 0.0
        %243 = vmatpush1.msra.mxu0 0.0
        %244 = vmatprep.subr.mxu0 0.0
        %245 = vmatpush1.msra.mxu0 0.0
        %246 = vmatprep.subr.mxu0 0.0
        %247 = vmatpush1.msra.mxu0 0.0
        %248 = vmatprep.subr.mxu0 0.0
        %249 = vmatpush1.msra.mxu0 0.0
        %250 = vmatprep.subr.mxu0 0.0
        %251 = vmatpush1.msra.mxu0 0.0
        %252 = vmatprep.subr.mxu0 0.0
        %253 = vmatpush1.msra.mxu0 0.0
        %254 = vmatprep.subr.mxu0 0.0
        %255 = vmatpush1.msra.mxu0 0.0
        %256 = vmatprep.subr.mxu0 0.0
        %257 = vmatpush1.msra.mxu0 0.0
        %258 = vmatprep.mubr.f32.mxu0 0.0
        %259 = vmatmul.mubr.f32.gmra.mrb[0].mxu0 %v183
        %v260 = vpop.f32.mrb[0].mxu0
        %v261 = vadd.f32 0.0, %v260
        %v262 = vpop.f32.mrb[0].mxu0
        %263 = vmatprep.mubr.f32.mxu0 0.0
        %264 = vmatmul.mubr.f32.gmra.mrb[0].mxu0 %v186
        %v265 = vpop.f32.mrb[0].mxu0
        %v266 = vadd.f32 0.0, %v265
        %v267 = vpop.f32.mrb[0].mxu0
        %268 = vmatprep.mubr.f32.mxu0 0.0
        %269 = vmatmul.mubr.f32.gmra.mrb[0].mxu0 %v189
        %v270 = vpop.f32.mrb[0].mxu0
        %v271 = vadd.f32 0.0, %v270
        %v272 = vpop.f32.mrb[0].mxu0
        %273 = vmatprep.mubr.f32.mxu0 0.0
        %274 = vmatmul.mubr.f32.gmra.mrb[0].mxu0 %v192
        %v275 = vpop.f32.mrb[0].mxu0
        %v276 = vadd.f32 0.0, %v275
        %v277 = vpop.f32.mrb[0].mxu0
        %278 = vdwg.mxu0
        %vm279 = vcmask 64512
        %280 = vst.msk [vmem:[%s161] sm:$0xff] %vm279, %v261
        %281 = vst.msk [vmem:[%s161 + $0x20] sm:$0xff] %vm279, %v266
        %282 = vst.msk [vmem:[%s161 + $0x40] sm:$0xff] %vm279, %v271
        %283 = vst.msk [vmem:[%s161 + $0x60] sm:$0xff] %vm279, %v276
        %s284 = scalar_lea.vmem %s0, 32
        %v285 = vld [vmem:[%s284] sm:$0xff]
        %v286 = vld [vmem:[%s284 + $0x8] sm:$0xff]
        %v287 = vld [vmem:[%s284 + $0x10] sm:$0xff]
        %v288 = vld [vmem:[%s284 + $0x18] sm:$0xff]
        %289 = vmatprep.subr.mxu0 0.0
        %290 = vmatpush1.msra.mxu0 %v285
        %291 = vmatprep.subr.mxu0 0.0
        %292 = vmatpush1.msra.mxu0 %v286
        %293 = vmatprep.subr.mxu0 0.0
        %294 = vmatpush1.msra.mxu0 %v287
        %295 = vmatprep.subr.mxu0 0.0
        %296 = vmatpush1.msra.mxu0 %v288
        %297 = vmatprep.subr.mxu0 0.0
        %298 = vmatpush1.msra.mxu0 0.0
        %299 = vmatprep.subr.mxu0 0.0
        %300 = vmatpush1.msra.mxu0 0.0
        %301 = vmatprep.subr.mxu0 0.0
        %302 = vmatpush1.msra.mxu0 0.0
        %303 = vmatprep.subr.mxu0 0.0
        %304 = vmatpush1.msra.mxu0 0.0
        %305 = vmatprep.subr.mxu0 0.0
        %306 = vmatpush1.msra.mxu0 0.0
        %307 = vmatprep.subr.mxu0 0.0
        %308 = vmatpush1.msra.mxu0 0.0
        %309 = vmatprep.subr.mxu0 0.0
        %310 = vmatpush1.msra.mxu0 0.0
        %311 = vmatprep.subr.mxu0 0.0
        %312 = vmatpush1.msra.mxu0 0.0
        %313 = vmatprep.subr.mxu0 0.0
        %314 = vmatpush1.msra.mxu0 0.0
        %315 = vmatprep.subr.mxu0 0.0
        %316 = vmatpush1.msra.mxu0 0.0
        %317 = vmatprep.subr.mxu0 0.0
        %318 = vmatpush1.msra.mxu0 0.0
        %319 = vmatprep.subr.mxu0 0.0
        %320 = vmatpush1.msra.mxu0 0.0
        %321 = vmatprep.subr.mxu0 0.0
        %322 = vmatpush1.msra.mxu0 0.0
        %323 = vmatprep.subr.mxu0 0.0
        %324 = vmatpush1.msra.mxu0 0.0
        %325 = vmatprep.subr.mxu0 0.0
        %326 = vmatpush1.msra.mxu0 0.0
        %327 = vmatprep.subr.mxu0 0.0
        %328 = vmatpush1.msra.mxu0 0.0
        %329 = vmatprep.subr.mxu0 0.0
        %330 = vmatpush1.msra.mxu0 0.0
        %331 = vmatprep.subr.mxu0 0.0
        %332 = vmatpush1.msra.mxu0 0.0
        %333 = vmatprep.subr.mxu0 0.0
        %334 = vmatpush1.msra.mxu0 0.0
        %335 = vmatprep.subr.mxu0 0.0
        %336 = vmatpush1.msra.mxu0 0.0
        %337 = vmatprep.subr.mxu0 0.0
        %338 = vmatpush1.msra.mxu0 0.0
        %339 = vmatprep.subr.mxu0 0.0
        %340 = vmatpush1.msra.mxu0 0.0
        %341 = vmatprep.subr.mxu0 0.0
        %342 = vmatpush1.msra.mxu0 0.0
        %343 = vmatprep.subr.mxu0 0.0
        %344 = vmatpush1.msra.mxu0 0.0
        %345 = vmatprep.subr.mxu0 0.0
        %346 = vmatpush1.msra.mxu0 0.0
        %347 = vmatprep.subr.mxu0 0.0
        %348 = vmatpush1.msra.mxu0 0.0
        %349 = vmatprep.subr.mxu0 0.0
        %350 = vmatpush1.msra.mxu0 0.0
        %351 = vmatprep.subr.mxu0 0.0
        %352 = vmatpush1.msra.mxu0 0.0
        %353 = vmatprep.mubr.f32.mxu0 0.0
        %354 = vmatmul.mubr.f32.gmra.mrb[0].mxu0 %v183
        %v355 = vpop.f32.mrb[0].mxu0
        %v356 = vadd.f32 0.0, %v355
        %v357 = vpop.f32.mrb[0].mxu0
        %358 = vmatprep.mubr.f32.mxu0 0.0
        %359 = vmatmul.mubr.f32.gmra.mrb[0].mxu0 %v186
        %v360 = vpop.f32.mrb[0].mxu0
        %v361 = vadd.f32 0.0, %v360
        %v362 = vpop.f32.mrb[0].mxu0
        %363 = vmatprep.mubr.f32.mxu0 0.0
        %364 = vmatmul.mubr.f32.gmra.mrb[0].mxu0 %v189
        %v365 = vpop.f32.mrb[0].mxu0
        %v366 = vadd.f32 0.0, %v365
        %v367 = vpop.f32.mrb[0].mxu0
        %368 = vmatprep.mubr.f32.mxu0 0.0
        %369 = vmatmul.mubr.f32.gmra.mrb[0].mxu0 %v192
        %v370 = vpop.f32.mrb[0].mxu0
        %v371 = vadd.f32 0.0, %v370
        %v372 = vpop.f32.mrb[0].mxu0
        %373 = vdwg.mxu0
        %s374 = scalar_lea.vmem %s161, 8 [#allocation2]
        %375 = vst.msk [vmem:[%s374] sm:$0xff] %vm279, %v356
        %376 = vst.msk [vmem:[%s374 + $0x20] sm:$0xff] %vm279, %v361
        %377 = vst.msk [vmem:[%s374 + $0x40] sm:$0xff] %vm279, %v366
        %378 = vst.msk [vmem:[%s374 + $0x60] sm:$0xff] %vm279, %v371
        %s379 = scalar_lea.vmem %s0, 64
        %v380 = vld [vmem:[%s379] sm:$0xff]
        %v381 = vld [vmem:[%s379 + $0x8] sm:$0xff]
        %v382 = vld [vmem:[%s379 + $0x10] sm:$0xff]
        %v383 = vld [vmem:[%s379 + $0x18] sm:$0xff]
        %384 = vmatprep.subr.mxu0 0.0
        %385 = vmatpush1.msra.mxu0 %v380
        %386 = vmatprep.subr.mxu0 0.0
        %387 = vmatpush1.msra.mxu0 %v381
        %388 = vmatprep.subr.mxu0 0.0
        %389 = vmatpush1.msra.mxu0 %v382
        %390 = vmatprep.subr.mxu0 0.0
        %391 = vmatpush1.msra.mxu0 %v383
        %392 = vmatprep.subr.mxu0 0.0
        %393 = vmatpush1.msra.mxu0 0.0
        %394 = vmatprep.subr.mxu0 0.0
        %395 = vmatpush1.msra.mxu0 0.0
        %396 = vmatprep.subr.mxu0 0.0
        %397 = vmatpush1.msra.mxu0 0.0
        %398 = vmatprep.subr.mxu0 0.0
        %399 = vmatpush1.msra.mxu0 0.0
        %400 = vmatprep.subr.mxu0 0.0
        %401 = vmatpush1.msra.mxu0 0.0
        %402 = vmatprep.subr.mxu0 0.0
        %403 = vmatpush1.msra.mxu0 0.0
        %404 = vmatprep.subr.mxu0 0.0
        %405 = vmatpush1.msra.mxu0 0.0
        %406 = vmatprep.subr.mxu0 0.0
        %407 = vmatpush1.msra.mxu0 0.0
        %408 = vmatprep.subr.mxu0 0.0
        %409 = vmatpush1.msra.mxu0 0.0
        %410 = vmatprep.subr.mxu0 0.0
        %411 = vmatpush1.msra.mxu0 0.0
        %412 = vmatprep.subr.mxu0 0.0
        %413 = vmatpush1.msra.mxu0 0.0
        %414 = vmatprep.subr.mxu0 0.0
        %415 = vmatpush1.msra.mxu0 0.0
        %416 = vmatprep.subr.mxu0 0.0
        %417 = vmatpush1.msra.mxu0 0.0
        %418 = vmatprep.subr.mxu0 0.0
        %419 = vmatpush1.msra.mxu0 0.0
        %420 = vmatprep.subr.mxu0 0.0
        %421 = vmatpush1.msra.mxu0 0.0
        %422 = vmatprep.subr.mxu0 0.0
        %423 = vmatpush1.msra.mxu0 0.0
        %424 = vmatprep.subr.mxu0 0.0
        %425 = vmatpush1.msra.mxu0 0.0
        %426 = vmatprep.subr.mxu0 0.0
        %427 = vmatpush1.msra.mxu0 0.0
        %428 = vmatprep.subr.mxu0 0.0
        %429 = vmatpush1.msra.mxu0 0.0
        %430 = vmatprep.subr.mxu0 0.0
        %431 = vmatpush1.msra.mxu0 0.0
        %432 = vmatprep.subr.mxu0 0.0
        %433 = vmatpush1.msra.mxu0 0.0
        %434 = vmatprep.subr.mxu0 0.0
        %435 = vmatpush1.msra.mxu0 0.0
        %436 = vmatprep.subr.mxu0 0.0
        %437 = vmatpush1.msra.mxu0 0.0
        %438 = vmatprep.subr.mxu0 0.0
        %439 = vmatpush1.msra.mxu0 0.0
        %440 = vmatprep.subr.mxu0 0.0
        %441 = vmatpush1.msra.mxu0 0.0
        %442 = vmatprep.subr.mxu0 0.0
        %443 = vmatpush1.msra.mxu0 0.0
        %444 = vmatprep.subr.mxu0 0.0
        %445 = vmatpush1.msra.mxu0 0.0
        %446 = vmatprep.subr.mxu0 0.0
        %447 = vmatpush1.msra.mxu0 0.0
        %448 = vmatprep.mubr.f32.mxu0 0.0
        %449 = vmatmul.mubr.f32.gmra.mrb[0].mxu0 %v183
        %v450 = vpop.f32.mrb[0].mxu0
        %v451 = vadd.f32 0.0, %v450
        %v452 = vpop.f32.mrb[0].mxu0
        %453 = vmatprep.mubr.f32.mxu0 0.0
        %454 = vmatmul.mubr.f32.gmra.mrb[0].mxu0 %v186
        %v455 = vpop.f32.mrb[0].mxu0
        %v456 = vadd.f32 0.0, %v455
        %v457 = vpop.f32.mrb[0].mxu0
        %458 = vmatprep.mubr.f32.mxu0 0.0
        %459 = vmatmul.mubr.f32.gmra.mrb[0].mxu0 %v189
        %v460 = vpop.f32.mrb[0].mxu0
        %v461 = vadd.f32 0.0, %v460
        %v462 = vpop.f32.mrb[0].mxu0
        %463 = vmatprep.mubr.f32.mxu0 0.0
        %464 = vmatmul.mubr.f32.gmra.mrb[0].mxu0 %v192
        %v465 = vpop.f32.mrb[0].mxu0
        %v466 = vadd.f32 0.0, %v465
        %v467 = vpop.f32.mrb[0].mxu0
        %468 = vdwg.mxu0
        %s469 = scalar_lea.vmem %s161, 16 [#allocation2]
        %470 = vst.msk [vmem:[%s469] sm:$0xff] %vm279, %v451
        %471 = vst.msk [vmem:[%s469 + $0x20] sm:$0xff] %vm279, %v456
        %472 = vst.msk [vmem:[%s469 + $0x40] sm:$0xff] %vm279, %v461
        %473 = vst.msk [vmem:[%s469 + $0x60] sm:$0xff] %vm279, %v466
        %s474 = scalar_lea.vmem %s0, 96
        %v475 = vld [vmem:[%s474] sm:$0xff]
        %v476 = vld [vmem:[%s474 + $0x8] sm:$0xff]
        %v477 = vld [vmem:[%s474 + $0x10] sm:$0xff]
        %v478 = vld [vmem:[%s474 + $0x18] sm:$0xff]
        %479 = vmatprep.subr.mxu0 0.0
        %480 = vmatpush1.msra.mxu0 %v475
        %481 = vmatprep.subr.mxu0 0.0
        %482 = vmatpush1.msra.mxu0 %v476
        %483 = vmatprep.subr.mxu0 0.0
        %484 = vmatpush1.msra.mxu0 %v477
        %485 = vmatprep.subr.mxu0 0.0
        %486 = vmatpush1.msra.mxu0 %v478
        %487 = vmatprep.subr.mxu0 0.0
        %488 = vmatpush1.msra.mxu0 0.0
        %489 = vmatprep.subr.mxu0 0.0
        %490 = vmatpush1.msra.mxu0 0.0
        %491 = vmatprep.subr.mxu0 0.0
        %492 = vmatpush1.msra.mxu0 0.0
        %493 = vmatprep.subr.mxu0 0.0
        %494 = vmatpush1.msra.mxu0 0.0
        %495 = vmatprep.subr.mxu0 0.0
        %496 = vmatpush1.msra.mxu0 0.0
        %497 = vmatprep.subr.mxu0 0.0
        %498 = vmatpush1.msra.mxu0 0.0
        %499 = vmatprep.subr.mxu0 0.0
        %500 = vmatpush1.msra.mxu0 0.0
        %501 = vmatprep.subr.mxu0 0.0
        %502 = vmatpush1.msra.mxu0 0.0
        %503 = vmatprep.subr.mxu0 0.0
        %504 = vmatpush1.msra.mxu0 0.0
        %505 = vmatprep.subr.mxu0 0.0
        %506 = vmatpush1.msra.mxu0 0.0
        %507 = vmatprep.subr.mxu0 0.0
        %508 = vmatpush1.msra.mxu0 0.0
        %509 = vmatprep.subr.mxu0 0.0
        %510 = vmatpush1.msra.mxu0 0.0
        %511 = vmatprep.subr.mxu0 0.0
        %512 = vmatpush1.msra.mxu0 0.0
        %513 = vmatprep.subr.mxu0 0.0
        %514 = vmatpush1.msra.mxu0 0.0
        %515 = vmatprep.subr.mxu0 0.0
        %516 = vmatpush1.msra.mxu0 0.0
        %517 = vmatprep.subr.mxu0 0.0
        %518 = vmatpush1.msra.mxu0 0.0
        %519 = vmatprep.subr.mxu0 0.0
        %520 = vmatpush1.msra.mxu0 0.0
        %521 = vmatprep.subr.mxu0 0.0
        %522 = vmatpush1.msra.mxu0 0.0
        %523 = vmatprep.subr.mxu0 0.0
        %524 = vmatpush1.msra.mxu0 0.0
        %525 = vmatprep.subr.mxu0 0.0
        %526 = vmatpush1.msra.mxu0 0.0
        %527 = vmatprep.subr.mxu0 0.0
        %528 = vmatpush1.msra.mxu0 0.0
        %529 = vmatprep.subr.mxu0 0.0
        %530 = vmatpush1.msra.mxu0 0.0
        %531 = vmatprep.subr.mxu0 0.0
        %532 = vmatpush1.msra.mxu0 0.0
        %533 = vmatprep.subr.mxu0 0.0
        %534 = vmatpush1.msra.mxu0 0.0
        %535 = vmatprep.subr.mxu0 0.0
        %536 = vmatpush1.msra.mxu0 0.0
        %537 = vmatprep.subr.mxu0 0.0
        %538 = vmatpush1.msra.mxu0 0.0
        %539 = vmatprep.subr.mxu0 0.0
        %540 = vmatpush1.msra.mxu0 0.0
        %541 = vmatprep.subr.mxu0 0.0
        %542 = vmatpush1.msra.mxu0 0.0
        %543 = vmatprep.mubr.f32.mxu0 0.0
        %544 = vmatmul.mubr.f32.gmra.mrb[0].mxu0 %v183
        %v545 = vpop.f32.mrb[0].mxu0
        %v546 = vadd.f32 0.0, %v545
        %v547 = vpop.f32.mrb[0].mxu0
        %548 = vmatprep.mubr.f32.mxu0 0.0
        %549 = vmatmul.mubr.f32.gmra.mrb[0].mxu0 %v186
        %v550 = vpop.f32.mrb[0].mxu0
        %v551 = vadd.f32 0.0, %v550
        %v552 = vpop.f32.mrb[0].mxu0
        %553 = vmatprep.mubr.f32.mxu0 0.0
        %554 = vmatmul.mubr.f32.gmra.mrb[0].mxu0 %v189
        %v555 = vpop.f32.mrb[0].mxu0
        %v556 = vadd.f32 0.0, %v555
        %v557 = vpop.f32.mrb[0].mxu0
        %558 = vmatprep.mubr.f32.mxu0 0.0
        %559 = vmatmul.mubr.f32.gmra.mrb[0].mxu0 %v192
        %v560 = vpop.f32.mrb[0].mxu0
        %v561 = vadd.f32 0.0, %v560
        %v562 = vpop.f32.mrb[0].mxu0
        %563 = vdwg.mxu0
        %s564 = scalar_lea.vmem %s161, 24 [#allocation2]
        %565 = vst.msk [vmem:[%s564] sm:$0xff] %vm279, %v546
        %566 = vst.msk [vmem:[%s564 + $0x20] sm:$0xff] %vm279, %v551
        %567 = vst.msk [vmem:[%s564 + $0x40] sm:$0xff] %vm279, %v556
        %568 = vst.msk [vmem:[%s564 + $0x60] sm:$0xff] %vm279, %v561
        %s569 = sand.u32 %s87, 1
        %s570 = scalar_lea.sflag [#allocation3], %s569
        %s571 = sand.u32 %s87, 1
        %s572 = smul.addr %s571, 128
        %s573 = scalar_lea.vmem [#allocation2], %s572
        // Predicated region
        $region29: #{tpu_custom_call.1} parent=27 // pred_check
          %p574 = pneg %p97
        $region30: #{tpu_custom_call.1} parent=27 // pred_check_branch
          %576 = sbr.rel (%p574) target = $region32
        $region31: #{tpu_custom_call.1} parent=27 // pred_region
          %s577 = smul.u32 4, %s21
          %s579 = ssub.s32 2048, 2048
          %580 = vsyncadd %s570, %s579
          %s581 = smul.addr %s577, 4
          %s582 = smul.addr %s20, 16
          %s583 = sadd.s32 %s581, %s582
          %s584 = smul.addr %s583, 128
          %s585 = scalar_lea.hbm %s2, %s584
          %s586 = sshll.u32 %s573, 4
          %s587 = int_to_ptr.vmem [resolvable:$true] %s586
          %592 = dma.vmem_to_hbm [thread:$0]  %s587, 2048, %s585, %s570, 128, 128, 8
        $region32: #{tpu_custom_call.1} parent=27 // pred_fallthru
          _
      $region28: #{tpu_custom_call.1} parent=5 // pred_fallthru
        _
      %p593 = scmp.le.s32.totalorder 2, %s11
      // Predicated region
      $region33: #{tpu_custom_call.1} parent=5 // pred_check
        %p594 = pneg %p593
      $region34: #{tpu_custom_call.1} parent=5 // pred_check_branch
        %596 = sbr.rel (%p594) target = $region36
      $region35: #{tpu_custom_call.1} parent=5 // pred_region
        %s597 = ssub.s32 %s11, 2
        // Predicated region
        $region37: #{tpu_custom_call.1} parent=35 // pred_check
          %p598 = pneg %p103
        $region38: #{tpu_custom_call.1} parent=35 // pred_check_branch
          %600 = sbr.rel (%p598) target = $region40
        $region39: #{tpu_custom_call.1} parent=35 // pred_region
          %s601 = sand.u32 %s88, 1
          %s602 = scalar_lea.sflag [#allocation3], %s601
          %s603 = sand.u32 %s88, 1
          %s604 = smul.addr %s603, 128
          %s605 = scalar_lea.vmem [#allocation2], %s604
          %606 = dma.done %s602, 2048
        $region40: #{tpu_custom_call.1} parent=35 // pred_fallthru
          _
      $region36: #{tpu_custom_call.1} parent=5 // pred_fallthru
        _
    $region6: #{tpu_custom_call.1} parent=1 // loop_footer
      %s15 = sadd.s32 1, %s11
    $region7: #{tpu_custom_call.1} parent=1 // loop_footer_branch
      %10 = sbr.rel target = $region3
    $region8: #{tpu_custom_call.1} parent=1 // loop_exit
      _
    %607 = vsyncpa [#allocation3], 1
    %s608 = scalar_lea.sflag [#allocation3], 1
    %609 = vsyncpa %s608, 1

</llo_original>
